<compile_context>
chip_gen: v7x
topology: tpu7x:2x2x1
jax: 0.10.0
libtpu: 0.0.40
codegen_flags: <defaults>
</compile_context>

<pallas_src>
import math

import jax
import jax.numpy as jnp
from jax.experimental import pallas as pl
from jax.experimental.pallas import tpu as pltpu

SELU_ALPHA = 1.6732632423543772
SELU_SCALE = 1.0507009873554805

# Hidden layer widths of surv_net (excluding in/out features).
HIDDEN = (128, 64, 64, 32, 32)


def _selu(x):
    # f32 elementwise; exp() issues on the EUP slot.
    # (exp(x)-1 instead of expm1: Mosaic-safe lowering; abs error near 0 ~1e-7.)
    return SELU_SCALE * jnp.where(x > 0, x, SELU_ALPHA * (jnp.exp(x) - 1.0))


def _sigmoid(x):
    # 1 / (1 + exp(-x)); approx reciprocal runs on the EUP slot (frees VALU).
    return pl.reciprocal(1.0 + jnp.exp(-x), approx=True)


def fidp_kernel(x_ref, *refs):
    # x_ref: (tb, IN); refs = (w1, b1, ..., w6, b6, out)
    # wk_ref: (dk, dk+1) bf16; bk_ref: (1, dk+1) f32; o_ref: (tb, OUT)
    *param_refs, o_ref = refs
    n_layers = len(param_refs) // 2

    h = x_ref[...].astype(jnp.float32)
    for l in range(n_layers):
        w_ref = param_refs[2 * l]
        b_ref = param_refs[2 * l + 1]
        # bf16 MXU operands, f32 accumulation, f32 bias add.
        z = jnp.dot(h.astype(jnp.bfloat16), w_ref[...],
                    preferred_element_type=jnp.float32) + b_ref[...]
        # Dropout(p=0.4): identity in inference/eval mode.
        h = _selu(z) if l < n_layers - 1 else _sigmoid(z)
    o_ref[...] = h.astype(o_ref.dtype)


def _round_up(x: int, m: int) -> int:
    return pl.cdiv(x, m) * m


def fidp_forward(x, params, *, tile_b: int = 1024):
    """FIDP forward. x: [B, IN]; params: list of 6 (W [din, dout], b [dout])."""
    assert len(params) == 6
    assert tile_b % 8 == 0

    B, IN = x.shape
    OUT = params[-1][0].shape[1]
    dims = [IN] + list(HIDDEN) + [OUT]

    # --- Batch tile: sublane-aligned, shrunk for small B, and capped so the
    # --- "parallel" batch axis has >= 2 grid steps (v7x has 2 TensorCores). --
    tb = min(tile_b, _round_up(B, 8))
    if B > 8:
        tb = min(tb, _round_up(pl.cdiv(B, 2), 8))
    grid = (pl.cdiv(B, tb),)  # ragged final block is masked by Pallas.

    # --- Flatten params: bf16 weights (MXU-native), f32 (1, dout) biases. ----
    flat_inputs = []
    param_specs = []
    for (w, b), din, dout in zip(params, dims[:-1], dims[1:]):
        assert w.shape == (din, dout) and b.shape == (dout,)
        flat_inputs.append(w.astype(jnp.bfloat16))
        flat_inputs.append(b.reshape(1, dout).astype(jnp.float32))
        # Whole-parameter blocks with constant index_map -> VMEM-resident.
        param_specs.append(pl.BlockSpec((din, dout), lambda i: (0, 0)))
        param_specs.append(pl.BlockSpec((1, dout), lambda i: (0, 0)))

    # --- Cost estimate (helps XLA schedule around the custom call). ----------
    matmul_flops = 2 * B * sum(a * b for a, b in zip(dims[:-1], dims[1:]))
    transcendentals = B * (sum(HIDDEN) + 2 * OUT)  # SELU exps + sigmoid exp/rcp
    bytes_accessed = (4 * B * IN + 4 * B * OUT
                      + 2 * sum(a * b for a, b in zip(dims[:-1], dims[1:]))
                      + 4 * sum(dims[1:]))
    cost = pl.CostEstimate(flops=matmul_flops,
                           transcendentals=transcendentals,
                           bytes_accessed=bytes_accessed)

    # NOTE: at tb<=1024 VMEM use (double-buffered x/out tiles + <40 KiB params
    # + (tb,128) f32 intermediates) is far below every generation's scoped
    # default (16 MiB on v5e); if tile_b is pushed >= ~4K, add
    # vmem_limit_bytes=... to CompilerParams explicitly.
    return pl.pallas_call(
        fidp_kernel,
        out_shape=jax.ShapeDtypeStruct((B, OUT), x.dtype),
        grid_spec=pltpu.PrefetchScalarGridSpec(
            num_scalar_prefetch=0,
            grid=grid,
            in_specs=[pl.BlockSpec((tb, IN), lambda i: (i, 0))] + param_specs,
            out_specs=pl.BlockSpec((tb, OUT), lambda i: (i, 0)),
        ),
        compiler_params=pltpu.CompilerParams(
            dimension_semantics=("parallel",),
        ),
        cost_estimate=cost,
    )(x, *flat_inputs)


# ----------------------------- reference & demo -----------------------------

def fidp_reference(x, params):
    h = x.astype(jnp.float32)
    for i, (w, b) in enumerate(params):
        h = jnp.dot(h, w) + b
        if i < len(params) - 1:
            h = SELU_SCALE * jnp.where(h > 0, h, SELU_ALPHA * (jnp.exp(h) - 1.0))
        else:
            h = 1.0 / (1.0 + jnp.exp(-h))
    return h


def init_params(key, in_features, out_features):
    dims = [in_features] + list(HIDDEN) + [out_features]
    keys = jax.random.split(key, len(dims) - 1)
    params = []
    for k, din, dout in zip(keys, dims[:-1], dims[1:]):
        kw, kb = jax.random.split(k)
        bound = 1.0 / math.sqrt(din)  # PyTorch nn.Linear default init
        w = jax.random.uniform(kw, (din, dout), jnp.float32, -bound, bound)
        b = jax.random.uniform(kb, (dout,), jnp.float32, -bound, bound)
        params.append((w, b))
    return params


if __name__ == "__main__":
    key = jax.random.PRNGKey(0)
    k_x, k_p = jax.random.split(key)

    batch = 16
    in_features = 16
    out_features = 4

    params = init_params(k_p, in_features, out_features)
    x = jax.random.normal(k_x, (batch, in_features), dtype=jnp.float32)

    # Default tile auto-shrinks to 8 here -> 2 grid steps (exercises tiling
    # and the 2-TC parallel batch axis).
    out = fidp_forward(x, params)
    out = jax.block_until_ready(out)

    ref = fidp_reference(x, params)
    assert out.shape == (batch, out_features)
    # bf16 MXU operands (f32 accumulation) -> loosened tolerance vs f32 ref.
    assert jnp.allclose(out, ref, atol=5e-2, rtol=5e-2), "mismatch vs reference"

    print("KERNEL_OK")
</pallas_src>

<mosaic_0001>
module attributes {stable_mosaic.version = 11 : i64} {
  func.func @fidp_kernel(%arg0: i32, %arg1: memref<8x16xf32, #tpu.memory_space<vmem>>, %arg2: memref<16x128xbf16, #tpu.memory_space<vmem>>, %arg3: memref<1x128xf32, #tpu.memory_space<vmem>>, %arg4: memref<128x64xbf16, #tpu.memory_space<vmem>>, %arg5: memref<1x64xf32, #tpu.memory_space<vmem>>, %arg6: memref<64x64xbf16, #tpu.memory_space<vmem>>, %arg7: memref<1x64xf32, #tpu.memory_space<vmem>>, %arg8: memref<64x32xbf16, #tpu.memory_space<vmem>>, %arg9: memref<1x32xf32, #tpu.memory_space<vmem>>, %arg10: memref<32x32xbf16, #tpu.memory_space<vmem>>, %arg11: memref<1x32xf32, #tpu.memory_space<vmem>>, %arg12: memref<32x4xbf16, #tpu.memory_space<vmem>>, %arg13: memref<1x4xf32, #tpu.memory_space<vmem>>, %arg14: memref<8x4xf32, #tpu.memory_space<vmem>>) attributes {dimension_semantics = [#tpu.dimension_semantics<parallel>], iteration_bounds = array<i64: 2>, scalar_prefetch = 0 : i64, scratch_operands = 0 : i64, tpu.core_type = #tpu.core_type<tc>, window_params = [{transform_indices = @transform_0, window_bounds = array<i64: 8, 16>}, {pipeline_mode = #tpu.pipeline_mode<synchronous>, transform_indices = @transform_1, window_bounds = array<i64: 16, 128>}, {pipeline_mode = #tpu.pipeline_mode<synchronous>, transform_indices = @transform_2, window_bounds = array<i64: 1, 128>}, {pipeline_mode = #tpu.pipeline_mode<synchronous>, transform_indices = @transform_3, window_bounds = array<i64: 128, 64>}, {pipeline_mode = #tpu.pipeline_mode<synchronous>, transform_indices = @transform_4, window_bounds = array<i64: 1, 64>}, {pipeline_mode = #tpu.pipeline_mode<synchronous>, transform_indices = @transform_5, window_bounds = array<i64: 64, 64>}, {pipeline_mode = #tpu.pipeline_mode<synchronous>, transform_indices = @transform_6, window_bounds = array<i64: 1, 64>}, {pipeline_mode = #tpu.pipeline_mode<synchronous>, transform_indices = @transform_7, window_bounds = array<i64: 64, 32>}, {pipeline_mode = #tpu.pipeline_mode<synchronous>, transform_indices = @transform_8, window_bounds = array<i64: 1, 32>}, {pipeline_mode = #tpu.pipeline_mode<synchronous>, transform_indices = @transform_9, window_bounds = array<i64: 32, 32>}, {pipeline_mode = #tpu.pipeline_mode<synchronous>, transform_indices = @transform_10, window_bounds = array<i64: 1, 32>}, {pipeline_mode = #tpu.pipeline_mode<synchronous>, transform_indices = @transform_11, window_bounds = array<i64: 32, 4>}, {pipeline_mode = #tpu.pipeline_mode<synchronous>, transform_indices = @transform_12, window_bounds = array<i64: 1, 4>}, {transform_indices = @transform_13, window_bounds = array<i64: 8, 4>}]} {
    %c0 = arith.constant 0 : index
    %c0_0 = arith.constant 0 : index
    %0 = vector.load %arg1[%c0, %c0_0] : memref<8x16xf32, #tpu.memory_space<vmem>>, vector<8x16xf32>
    %1 = arith.truncf %0 : vector<8x16xf32> to vector<8x16xbf16>
    %c0_1 = arith.constant 0 : index
    %c0_2 = arith.constant 0 : index
    %2 = vector.load %arg2[%c0_1, %c0_2] : memref<16x128xbf16, #tpu.memory_space<vmem>>, vector<16x128xbf16>
    %cst = arith.constant dense<0.000000e+00> : vector<8x128xf32>
    %3 = tpu.matmul %1, %2, %cst {dimension_numbers = #tpu.dot_dimension_numbers<[1], [0], [0], [1], [0, 0, 1, 1], [], []>} : vector<8x16xbf16>, vector<16x128xbf16>, vector<8x128xf32> -> vector<8x128xf32>
    %c0_3 = arith.constant 0 : index
    %c0_4 = arith.constant 0 : index
    %4 = vector.load %arg3[%c0_3, %c0_4] : memref<1x128xf32, #tpu.memory_space<vmem>>, vector<1x128xf32>
    %5 = vector.broadcast %4 : vector<1x128xf32> to vector<8x128xf32>
    %6 = arith.addf %3, %5 : vector<8x128xf32>
    %cst_5 = arith.constant 0.000000e+00 : f32
    %7 = vector.broadcast %cst_5 : f32 to vector<8x128xf32>
    %8 = arith.cmpf ogt, %6, %7 : vector<8x128xf32>
    %9 = math.exp %6 : vector<8x128xf32>
    %cst_6 = arith.constant 1.000000e+00 : f32
    %10 = vector.broadcast %cst_6 : f32 to vector<8x128xf32>
    %11 = arith.subf %9, %10 : vector<8x128xf32>
    %cst_7 = arith.constant 1.67326319 : f32
    %12 = vector.broadcast %cst_7 : f32 to vector<8x128xf32>
    %13 = arith.mulf %12, %11 : vector<8x128xf32>
    %14 = arith.select %8, %6, %13 : vector<8x128xi1>, vector<8x128xf32>
    %cst_8 = arith.constant 1.05070102 : f32
    %15 = vector.broadcast %cst_8 : f32 to vector<8x128xf32>
    %16 = arith.mulf %15, %14 : vector<8x128xf32>
    %17 = arith.truncf %16 : vector<8x128xf32> to vector<8x128xbf16>
    %c0_9 = arith.constant 0 : index
    %c0_10 = arith.constant 0 : index
    %18 = vector.load %arg4[%c0_9, %c0_10] : memref<128x64xbf16, #tpu.memory_space<vmem>>, vector<128x64xbf16>
    %cst_11 = arith.constant dense<0.000000e+00> : vector<8x64xf32>
    %19 = tpu.matmul %17, %18, %cst_11 {dimension_numbers = #tpu.dot_dimension_numbers<[1], [0], [0], [1], [0, 0, 1, 1], [], []>} : vector<8x128xbf16>, vector<128x64xbf16>, vector<8x64xf32> -> vector<8x64xf32>
    %c0_12 = arith.constant 0 : index
    %c0_13 = arith.constant 0 : index
    %20 = vector.load %arg5[%c0_12, %c0_13] : memref<1x64xf32, #tpu.memory_space<vmem>>, vector<1x64xf32>
    %21 = vector.broadcast %20 : vector<1x64xf32> to vector<8x64xf32>
    %22 = arith.addf %19, %21 : vector<8x64xf32>
    %cst_14 = arith.constant 0.000000e+00 : f32
    %23 = vector.broadcast %cst_14 : f32 to vector<8x64xf32>
    %24 = arith.cmpf ogt, %22, %23 : vector<8x64xf32>
    %25 = math.exp %22 : vector<8x64xf32>
    %cst_15 = arith.constant 1.000000e+00 : f32
    %26 = vector.broadcast %cst_15 : f32 to vector<8x64xf32>
    %27 = arith.subf %25, %26 : vector<8x64xf32>
    %cst_16 = arith.constant 1.67326319 : f32
    %28 = vector.broadcast %cst_16 : f32 to vector<8x64xf32>
    %29 = arith.mulf %28, %27 : vector<8x64xf32>
    %30 = arith.select %24, %22, %29 : vector<8x64xi1>, vector<8x64xf32>
    %cst_17 = arith.constant 1.05070102 : f32
    %31 = vector.broadcast %cst_17 : f32 to vector<8x64xf32>
    %32 = arith.mulf %31, %30 : vector<8x64xf32>
    %33 = arith.truncf %32 : vector<8x64xf32> to vector<8x64xbf16>
    %c0_18 = arith.constant 0 : index
    %c0_19 = arith.constant 0 : index
    %34 = vector.load %arg6[%c0_18, %c0_19] : memref<64x64xbf16, #tpu.memory_space<vmem>>, vector<64x64xbf16>
    %cst_20 = arith.constant dense<0.000000e+00> : vector<8x64xf32>
    %35 = tpu.matmul %33, %34, %cst_20 {dimension_numbers = #tpu.dot_dimension_numbers<[1], [0], [0], [1], [0, 0, 1, 1], [], []>} : vector<8x64xbf16>, vector<64x64xbf16>, vector<8x64xf32> -> vector<8x64xf32>
    %c0_21 = arith.constant 0 : index
    %c0_22 = arith.constant 0 : index
    %36 = vector.load %arg7[%c0_21, %c0_22] : memref<1x64xf32, #tpu.memory_space<vmem>>, vector<1x64xf32>
    %37 = vector.broadcast %36 : vector<1x64xf32> to vector<8x64xf32>
    %38 = arith.addf %35, %37 : vector<8x64xf32>
    %cst_23 = arith.constant 0.000000e+00 : f32
    %39 = vector.broadcast %cst_23 : f32 to vector<8x64xf32>
    %40 = arith.cmpf ogt, %38, %39 : vector<8x64xf32>
    %41 = math.exp %38 : vector<8x64xf32>
    %cst_24 = arith.constant 1.000000e+00 : f32
    %42 = vector.broadcast %cst_24 : f32 to vector<8x64xf32>
    %43 = arith.subf %41, %42 : vector<8x64xf32>
    %cst_25 = arith.constant 1.67326319 : f32
    %44 = vector.broadcast %cst_25 : f32 to vector<8x64xf32>
    %45 = arith.mulf %44, %43 : vector<8x64xf32>
    %46 = arith.select %40, %38, %45 : vector<8x64xi1>, vector<8x64xf32>
    %cst_26 = arith.constant 1.05070102 : f32
    %47 = vector.broadcast %cst_26 : f32 to vector<8x64xf32>
    %48 = arith.mulf %47, %46 : vector<8x64xf32>
    %49 = arith.truncf %48 : vector<8x64xf32> to vector<8x64xbf16>
    %c0_27 = arith.constant 0 : index
    %c0_28 = arith.constant 0 : index
    %50 = vector.load %arg8[%c0_27, %c0_28] : memref<64x32xbf16, #tpu.memory_space<vmem>>, vector<64x32xbf16>
    %cst_29 = arith.constant dense<0.000000e+00> : vector<8x32xf32>
    %51 = tpu.matmul %49, %50, %cst_29 {dimension_numbers = #tpu.dot_dimension_numbers<[1], [0], [0], [1], [0, 0, 1, 1], [], []>} : vector<8x64xbf16>, vector<64x32xbf16>, vector<8x32xf32> -> vector<8x32xf32>
    %c0_30 = arith.constant 0 : index
    %c0_31 = arith.constant 0 : index
    %52 = vector.load %arg9[%c0_30, %c0_31] : memref<1x32xf32, #tpu.memory_space<vmem>>, vector<1x32xf32>
    %53 = vector.broadcast %52 : vector<1x32xf32> to vector<8x32xf32>
    %54 = arith.addf %51, %53 : vector<8x32xf32>
    %cst_32 = arith.constant 0.000000e+00 : f32
    %55 = vector.broadcast %cst_32 : f32 to vector<8x32xf32>
    %56 = arith.cmpf ogt, %54, %55 : vector<8x32xf32>
    %57 = math.exp %54 : vector<8x32xf32>
    %cst_33 = arith.constant 1.000000e+00 : f32
    %58 = vector.broadcast %cst_33 : f32 to vector<8x32xf32>
    %59 = arith.subf %57, %58 : vector<8x32xf32>
    %cst_34 = arith.constant 1.67326319 : f32
    %60 = vector.broadcast %cst_34 : f32 to vector<8x32xf32>
    %61 = arith.mulf %60, %59 : vector<8x32xf32>
    %62 = arith.select %56, %54, %61 : vector<8x32xi1>, vector<8x32xf32>
    %cst_35 = arith.constant 1.05070102 : f32
    %63 = vector.broadcast %cst_35 : f32 to vector<8x32xf32>
    %64 = arith.mulf %63, %62 : vector<8x32xf32>
    %65 = arith.truncf %64 : vector<8x32xf32> to vector<8x32xbf16>
    %c0_36 = arith.constant 0 : index
    %c0_37 = arith.constant 0 : index
    %66 = vector.load %arg10[%c0_36, %c0_37] : memref<32x32xbf16, #tpu.memory_space<vmem>>, vector<32x32xbf16>
    %cst_38 = arith.constant dense<0.000000e+00> : vector<8x32xf32>
    %67 = tpu.matmul %65, %66, %cst_38 {dimension_numbers = #tpu.dot_dimension_numbers<[1], [0], [0], [1], [0, 0, 1, 1], [], []>} : vector<8x32xbf16>, vector<32x32xbf16>, vector<8x32xf32> -> vector<8x32xf32>
    %c0_39 = arith.constant 0 : index
    %c0_40 = arith.constant 0 : index
    %68 = vector.load %arg11[%c0_39, %c0_40] : memref<1x32xf32, #tpu.memory_space<vmem>>, vector<1x32xf32>
    %69 = vector.broadcast %68 : vector<1x32xf32> to vector<8x32xf32>
    %70 = arith.addf %67, %69 : vector<8x32xf32>
    %cst_41 = arith.constant 0.000000e+00 : f32
    %71 = vector.broadcast %cst_41 : f32 to vector<8x32xf32>
    %72 = arith.cmpf ogt, %70, %71 : vector<8x32xf32>
    %73 = math.exp %70 : vector<8x32xf32>
    %cst_42 = arith.constant 1.000000e+00 : f32
    %74 = vector.broadcast %cst_42 : f32 to vector<8x32xf32>
    %75 = arith.subf %73, %74 : vector<8x32xf32>
    %cst_43 = arith.constant 1.67326319 : f32
    %76 = vector.broadcast %cst_43 : f32 to vector<8x32xf32>
    %77 = arith.mulf %76, %75 : vector<8x32xf32>
    %78 = arith.select %72, %70, %77 : vector<8x32xi1>, vector<8x32xf32>
    %cst_44 = arith.constant 1.05070102 : f32
    %79 = vector.broadcast %cst_44 : f32 to vector<8x32xf32>
    %80 = arith.mulf %79, %78 : vector<8x32xf32>
    %81 = arith.truncf %80 : vector<8x32xf32> to vector<8x32xbf16>
    %c0_45 = arith.constant 0 : index
    %c0_46 = arith.constant 0 : index
    %82 = vector.load %arg12[%c0_45, %c0_46] : memref<32x4xbf16, #tpu.memory_space<vmem>>, vector<32x4xbf16>
    %cst_47 = arith.constant dense<0.000000e+00> : vector<8x4xf32>
    %83 = tpu.matmul %81, %82, %cst_47 {dimension_numbers = #tpu.dot_dimension_numbers<[1], [0], [0], [1], [0, 0, 1, 1], [], []>} : vector<8x32xbf16>, vector<32x4xbf16>, vector<8x4xf32> -> vector<8x4xf32>
    %c0_48 = arith.constant 0 : index
    %c0_49 = arith.constant 0 : index
    %84 = vector.load %arg13[%c0_48, %c0_49] : memref<1x4xf32, #tpu.memory_space<vmem>>, vector<1x4xf32>
    %85 = vector.broadcast %84 : vector<1x4xf32> to vector<8x4xf32>
    %86 = arith.addf %83, %85 : vector<8x4xf32>
    %cst_50 = arith.constant 0.000000e+00 : f32
    %87 = vector.broadcast %cst_50 : f32 to vector<8x4xf32>
    %88 = arith.subf %87, %86 : vector<8x4xf32>
    %89 = math.exp %88 : vector<8x4xf32>
    %cst_51 = arith.constant 1.000000e+00 : f32
    %90 = vector.broadcast %cst_51 : f32 to vector<8x4xf32>
    %91 = arith.addf %90, %89 : vector<8x4xf32>
    %92 = tpu.reciprocal %91 {approx = true} : vector<8x4xf32> -> vector<8x4xf32>
    %c0_52 = arith.constant 0 : index
    %c0_53 = arith.constant 0 : index
    %93 = vector.load %arg14[%c0_52, %c0_53] : memref<8x4xf32, #tpu.memory_space<vmem>>, vector<8x4xf32>
    tpu.vector_store %arg14[%c0_52, %c0_53], %92 {strides = array<i32>} : memref<8x4xf32, #tpu.memory_space<vmem>>, vector<8x4xf32>,
    return
  }
  func.func @transform_0(%arg0: i32) -> (i32, i32) {
    %c0_i32 = arith.constant 0 : i32
    %c0_i32_0 = arith.constant 0 : i32
    return %arg0, %c0_i32 : i32, i32
  }
  func.func @transform_1(%arg0: i32) -> (i32, i32) {
    %c0_i32 = arith.constant 0 : i32
    %c0_i32_0 = arith.constant 0 : i32
    %c0_i32_1 = arith.constant 0 : i32
    return %c0_i32, %c0_i32_0 : i32, i32
  }
  func.func @transform_2(%arg0: i32) -> (i32, i32) {
    %c0_i32 = arith.constant 0 : i32
    %c0_i32_0 = arith.constant 0 : i32
    %c0_i32_1 = arith.constant 0 : i32
    return %c0_i32, %c0_i32_0 : i32, i32
  }
  func.func @transform_3(%arg0: i32) -> (i32, i32) {
    %c0_i32 = arith.constant 0 : i32
    %c0_i32_0 = arith.constant 0 : i32
    %c0_i32_1 = arith.constant 0 : i32
    return %c0_i32, %c0_i32_0 : i32, i32
  }
  func.func @transform_4(%arg0: i32) -> (i32, i32) {
    %c0_i32 = arith.constant 0 : i32
    %c0_i32_0 = arith.constant 0 : i32
    %c0_i32_1 = arith.constant 0 : i32
    return %c0_i32, %c0_i32_0 : i32, i32
  }
  func.func @transform_5(%arg0: i32) -> (i32, i32) {
    %c0_i32 = arith.constant 0 : i32
    %c0_i32_0 = arith.constant 0 : i32
    %c0_i32_1 = arith.constant 0 : i32
    return %c0_i32, %c0_i32_0 : i32, i32
  }
  func.func @transform_6(%arg0: i32) -> (i32, i32) {
    %c0_i32 = arith.constant 0 : i32
    %c0_i32_0 = arith.constant 0 : i32
    %c0_i32_1 = arith.constant 0 : i32
    return %c0_i32, %c0_i32_0 : i32, i32
  }
  func.func @transform_7(%arg0: i32) -> (i32, i32) {
    %c0_i32 = arith.constant 0 : i32
    %c0_i32_0 = arith.constant 0 : i32
    %c0_i32_1 = arith.constant 0 : i32
    return %c0_i32, %c0_i32_0 : i32, i32
  }
  func.func @transform_8(%arg0: i32) -> (i32, i32) {
    %c0_i32 = arith.constant 0 : i32
    %c0_i32_0 = arith.constant 0 : i32
    %c0_i32_1 = arith.constant 0 : i32
    return %c0_i32, %c0_i32_0 : i32, i32
  }
  func.func @transform_9(%arg0: i32) -> (i32, i32) {
    %c0_i32 = arith.constant 0 : i32
    %c0_i32_0 = arith.constant 0 : i32
    %c0_i32_1 = arith.constant 0 : i32
    return %c0_i32, %c0_i32_0 : i32, i32
  }
  func.func @transform_10(%arg0: i32) -> (i32, i32) {
    %c0_i32 = arith.constant 0 : i32
    %c0_i32_0 = arith.constant 0 : i32
    %c0_i32_1 = arith.constant 0 : i32
    return %c0_i32, %c0_i32_0 : i32, i32
  }
  func.func @transform_11(%arg0: i32) -> (i32, i32) {
    %c0_i32 = arith.constant 0 : i32
    %c0_i32_0 = arith.constant 0 : i32
    %c0_i32_1 = arith.constant 0 : i32
    return %c0_i32, %c0_i32_0 : i32, i32
  }
  func.func @transform_12(%arg0: i32) -> (i32, i32) {
    %c0_i32 = arith.constant 0 : i32
    %c0_i32_0 = arith.constant 0 : i32
    %c0_i32_1 = arith.constant 0 : i32
    return %c0_i32, %c0_i32_0 : i32, i32
  }
  func.func @transform_13(%arg0: i32) -> (i32, i32) {
    %c0_i32 = arith.constant 0 : i32
    %c0_i32_0 = arith.constant 0 : i32
    return %arg0, %c0_i32 : i32, i32
  }
}

</mosaic_0001>

<llo_original>
// kernel: tpu_custom_call.1
$region0: #{tpu_custom_call.1}
  #allocation0 [shape = 'u32[]', space=smem, size = 0x4, offset = 0x4, fixed_abs, tag = 'smem constant byte address 0x4 - core index']
  #allocation1 [shape = 'u32[144,128]{1,0:T(1,128)}', space=vmem, size = 0x12000, scoped, tag = 'internal scratch']
  %s0 = inlined_call_operand.vmem [shape: f32[16,16], index: 0, kind: input, shape index: {}]
  %s1 = inlined_call_operand.vmem [shape: bf16[16,128], index: 1, kind: input, shape index: {}]
  %s2 = inlined_call_operand.vmem [shape: f32[1,128], index: 2, kind: input, shape index: {}]
  %s3 = inlined_call_operand.vmem [shape: bf16[128,64], index: 3, kind: input, shape index: {}]
  %s4 = inlined_call_operand.vmem [shape: f32[1,64], index: 4, kind: input, shape index: {}]
  %s5 = inlined_call_operand.vmem [shape: bf16[64,64], index: 5, kind: input, shape index: {}]
  %s6 = inlined_call_operand.vmem [shape: f32[1,64], index: 6, kind: input, shape index: {}]
  %s7 = inlined_call_operand.vmem [shape: bf16[64,32], index: 7, kind: input, shape index: {}]
  %s8 = inlined_call_operand.vmem [shape: f32[1,32], index: 8, kind: input, shape index: {}]
  %s9 = inlined_call_operand.vmem [shape: bf16[32,32], index: 9, kind: input, shape index: {}]
  %s10 = inlined_call_operand.vmem [shape: f32[1,32], index: 10, kind: input, shape index: {}]
  %s11 = inlined_call_operand.vmem [shape: bf16[32,4], index: 11, kind: input, shape index: {}]
  %s12 = inlined_call_operand.vmem [shape: f32[1,4], index: 12, kind: input, shape index: {}]
  %s13 = inlined_call_operand.vmem [shape: f32[16,4], index: 13, kind: output, shape index: {}]
  %s14 = sld [smem:[#allocation0]]
  $region85: #{tpu_custom_call.1} parent=0
    _
  %s16 = ssub.s32 1, %s14
  %s17 = scalar_select 0, %s16, %s14
  loop: start=0, step=1, limit=4
  $region2: #{tpu_custom_call.1} parent=0 // loop_pre_header
    _
  $region3: #{tpu_custom_call.1} parent=0 // loop_header
    %s19 = sphi 0, %s23
    %p20 = scmp.ge.s32.totalorder %s19, 4
    %s29 = sphi 0, %s31
    %s32 = sphi 0, %s29
    %s33 = sphi 0, %s32
    %s49 = sphi 0, %s33
    %s53 = sphi 0, %s53
    %s55 = sphi 0, %s53
    %s56 = sphi 0, %s55
    %s70 = sphi 0, %s56
    %s74 = sphi 0, %s74
    %s76 = sphi 0, %s74
    %s77 = sphi 0, %s76
    %s91 = sphi 0, %s77
    %s95 = sphi 0, %s95
    %s97 = sphi 0, %s95
    %s98 = sphi 0, %s97
    %s112 = sphi 0, %s98
    %s116 = sphi 0, %s116
    %s118 = sphi 0, %s116
    %s119 = sphi 0, %s118
    %s133 = sphi 0, %s119
    %s137 = sphi 0, %s137
    %s139 = sphi 0, %s137
    %s140 = sphi 0, %s139
    %s154 = sphi 0, %s140
    %s158 = sphi 0, %s158
    %s160 = sphi 0, %s158
    %s161 = sphi 0, %s160
    %s175 = sphi 0, %s161
    %s179 = sphi 0, %s179
    %s181 = sphi 0, %s179
    %s182 = sphi 0, %s181
    %s196 = sphi 0, %s182
    %s200 = sphi 0, %s200
    %s202 = sphi 0, %s200
    %s203 = sphi 0, %s202
    %s217 = sphi 0, %s203
    %s221 = sphi 0, %s221
    %s223 = sphi 0, %s221
    %s224 = sphi 0, %s223
    %s238 = sphi 0, %s224
    %s242 = sphi 0, %s242
    %s244 = sphi 0, %s242
    %s245 = sphi 0, %s244
    %s259 = sphi 0, %s245
    %s263 = sphi 0, %s263
    %s265 = sphi 0, %s263
    %s266 = sphi 0, %s265
    %s280 = sphi 0, %s266
    %s284 = sphi 0, %s284
    %s286 = sphi 0, %s284
    %s287 = sphi 0, %s286
    %s301 = sphi 0, %s287
    %s307 = sphi 0, %s309
    %s310 = sphi 0, %s307
    %s311 = sphi 0, %s310
    %s327 = sphi 0, %s311
  $region4: #{tpu_custom_call.1} parent=0 // loop_header_branch
    %22 = sbr.rel (%p20) target = $region8
  $region5: #{tpu_custom_call.1} parent=0 // loop_body
    %s24 = ssub.s32 %s19, 1
    %s25 = ssub.s32 %s19, 2
    %s26 = sadd.s32 %s19, 1
    %s27 = ssub.s32 %s19, %s26
    %p28 = scmp.eq.s32.totalorder %s27, 0
    %s30 = sadd.s32 %s29, 1
    %s31 = scalar_select %p28, %s29, %s30
    %p34 = pneg %p28
    %p35 = scmp.eq.s32.totalorder %s19, 1
    %p36 = por %p34, %p35
    %p37 = scmp.ne.s32.totalorder %s29, %s32
    %p38 = scmp.eq.s32.totalorder %s19, 0
    %p39 = por %p37, %p38
    %p40 = scmp.ne.s32.totalorder %s29, %s32
    %p41 = scmp.eq.s32.totalorder %s24, 1
    %p42 = por %p40, %p41
    %p43 = scmp.ne.s32.totalorder %s32, %s33
    %p44 = scmp.eq.s32.totalorder %s24, 0
    %p45 = por %p43, %p44
    %p46 = scmp.ne.s32.totalorder %s32, %s33
    %p47 = scmp.eq.s32.totalorder %s25, 1
    %p48 = por %p46, %p47
    %p50 = scmp.ne.s32.totalorder %s33, %s49
    %p51 = scmp.eq.s32.totalorder %s25, 0
    %p52 = por %p50, %p51
    %s54 = sadd.s32 %s53, 1
    %p57 = scmp.eq.s32.totalorder %s19, 1
    %p58 = scmp.ne.s32.totalorder %s53, %s55
    %p59 = scmp.eq.s32.totalorder %s19, 0
    %p60 = por %p58, %p59
    %p61 = scmp.ne.s32.totalorder %s53, %s55
    %p62 = scmp.eq.s32.totalorder %s24, 1
    %p63 = por %p61, %p62
    %p64 = scmp.ne.s32.totalorder %s55, %s56
    %p65 = scmp.eq.s32.totalorder %s24, 0
    %p66 = por %p64, %p65
    %p67 = scmp.ne.s32.totalorder %s55, %s56
    %p68 = scmp.eq.s32.totalorder %s25, 1
    %p69 = por %p67, %p68
    %p71 = scmp.ne.s32.totalorder %s56, %s70
    %p72 = scmp.eq.s32.totalorder %s25, 0
    %p73 = por %p71, %p72
    %s75 = sadd.s32 %s74, 1
    %p78 = scmp.eq.s32.totalorder %s19, 1
    %p79 = scmp.ne.s32.totalorder %s74, %s76
    %p80 = scmp.eq.s32.totalorder %s19, 0
    %p81 = por %p79, %p80
    %p82 = scmp.ne.s32.totalorder %s74, %s76
    %p83 = scmp.eq.s32.totalorder %s24, 1
    %p84 = por %p82, %p83
    %p85 = scmp.ne.s32.totalorder %s76, %s77
    %p86 = scmp.eq.s32.totalorder %s24, 0
    %p87 = por %p85, %p86
    %p88 = scmp.ne.s32.totalorder %s76, %s77
    %p89 = scmp.eq.s32.totalorder %s25, 1
    %p90 = por %p88, %p89
    %p92 = scmp.ne.s32.totalorder %s77, %s91
    %p93 = scmp.eq.s32.totalorder %s25, 0
    %p94 = por %p92, %p93
    %s96 = sadd.s32 %s95, 1
    %p99 = scmp.eq.s32.totalorder %s19, 1
    %p100 = scmp.ne.s32.totalorder %s95, %s97
    %p101 = scmp.eq.s32.totalorder %s19, 0
    %p102 = por %p100, %p101
    %p103 = scmp.ne.s32.totalorder %s95, %s97
    %p104 = scmp.eq.s32.totalorder %s24, 1
    %p105 = por %p103, %p104
    %p106 = scmp.ne.s32.totalorder %s97, %s98
    %p107 = scmp.eq.s32.totalorder %s24, 0
    %p108 = por %p106, %p107
    %p109 = scmp.ne.s32.totalorder %s97, %s98
    %p110 = scmp.eq.s32.totalorder %s25, 1
    %p111 = por %p109, %p110
    %p113 = scmp.ne.s32.totalorder %s98, %s112
    %p114 = scmp.eq.s32.totalorder %s25, 0
    %p115 = por %p113, %p114
    %s117 = sadd.s32 %s116, 1
    %p120 = scmp.eq.s32.totalorder %s19, 1
    %p121 = scmp.ne.s32.totalorder %s116, %s118
    %p122 = scmp.eq.s32.totalorder %s19, 0
    %p123 = por %p121, %p122
    %p124 = scmp.ne.s32.totalorder %s116, %s118
    %p125 = scmp.eq.s32.totalorder %s24, 1
    %p126 = por %p124, %p125
    %p127 = scmp.ne.s32.totalorder %s118, %s119
    %p128 = scmp.eq.s32.totalorder %s24, 0
    %p129 = por %p127, %p128
    %p130 = scmp.ne.s32.totalorder %s118, %s119
    %p131 = scmp.eq.s32.totalorder %s25, 1
    %p132 = por %p130, %p131
    %p134 = scmp.ne.s32.totalorder %s119, %s133
    %p135 = scmp.eq.s32.totalorder %s25, 0
    %p136 = por %p134, %p135
    %s138 = sadd.s32 %s137, 1
    %p141 = scmp.eq.s32.totalorder %s19, 1
    %p142 = scmp.ne.s32.totalorder %s137, %s139
    %p143 = scmp.eq.s32.totalorder %s19, 0
    %p144 = por %p142, %p143
    %p145 = scmp.ne.s32.totalorder %s137, %s139
    %p146 = scmp.eq.s32.totalorder %s24, 1
    %p147 = por %p145, %p146
    %p148 = scmp.ne.s32.totalorder %s139, %s140
    %p149 = scmp.eq.s32.totalorder %s24, 0
    %p150 = por %p148, %p149
    %p151 = scmp.ne.s32.totalorder %s139, %s140
    %p152 = scmp.eq.s32.totalorder %s25, 1
    %p153 = por %p151, %p152
    %p155 = scmp.ne.s32.totalorder %s140, %s154
    %p156 = scmp.eq.s32.totalorder %s25, 0
    %p157 = por %p155, %p156
    %s159 = sadd.s32 %s158, 1
    %p162 = scmp.eq.s32.totalorder %s19, 1
    %p163 = scmp.ne.s32.totalorder %s158, %s160
    %p164 = scmp.eq.s32.totalorder %s19, 0
    %p165 = por %p163, %p164
    %p166 = scmp.ne.s32.totalorder %s158, %s160
    %p167 = scmp.eq.s32.totalorder %s24, 1
    %p168 = por %p166, %p167
    %p169 = scmp.ne.s32.totalorder %s160, %s161
    %p170 = scmp.eq.s32.totalorder %s24, 0
    %p171 = por %p169, %p170
    %p172 = scmp.ne.s32.totalorder %s160, %s161
    %p173 = scmp.eq.s32.totalorder %s25, 1
    %p174 = por %p172, %p173
    %p176 = scmp.ne.s32.totalorder %s161, %s175
    %p177 = scmp.eq.s32.totalorder %s25, 0
    %p178 = por %p176, %p177
    %s180 = sadd.s32 %s179, 1
    %p183 = scmp.eq.s32.totalorder %s19, 1
    %p184 = scmp.ne.s32.totalorder %s179, %s181
    %p185 = scmp.eq.s32.totalorder %s19, 0
    %p186 = por %p184, %p185
    %p187 = scmp.ne.s32.totalorder %s179, %s181
    %p188 = scmp.eq.s32.totalorder %s24, 1
    %p189 = por %p187, %p188
    %p190 = scmp.ne.s32.totalorder %s181, %s182
    %p191 = scmp.eq.s32.totalorder %s24, 0
    %p192 = por %p190, %p191
    %p193 = scmp.ne.s32.totalorder %s181, %s182
    %p194 = scmp.eq.s32.totalorder %s25, 1
    %p195 = por %p193, %p194
    %p197 = scmp.ne.s32.totalorder %s182, %s196
    %p198 = scmp.eq.s32.totalorder %s25, 0
    %p199 = por %p197, %p198
    %s201 = sadd.s32 %s200, 1
    %p204 = scmp.eq.s32.totalorder %s19, 1
    %p205 = scmp.ne.s32.totalorder %s200, %s202
    %p206 = scmp.eq.s32.totalorder %s19, 0
    %p207 = por %p205, %p206
    %p208 = scmp.ne.s32.totalorder %s200, %s202
    %p209 = scmp.eq.s32.totalorder %s24, 1
    %p210 = por %p208, %p209
    %p211 = scmp.ne.s32.totalorder %s202, %s203
    %p212 = scmp.eq.s32.totalorder %s24, 0
    %p213 = por %p211, %p212
    %p214 = scmp.ne.s32.totalorder %s202, %s203
    %p215 = scmp.eq.s32.totalorder %s25, 1
    %p216 = por %p214, %p215
    %p218 = scmp.ne.s32.totalorder %s203, %s217
    %p219 = scmp.eq.s32.totalorder %s25, 0
    %p220 = por %p218, %p219
    %s222 = sadd.s32 %s221, 1
    %p225 = scmp.eq.s32.totalorder %s19, 1
    %p226 = scmp.ne.s32.totalorder %s221, %s223
    %p227 = scmp.eq.s32.totalorder %s19, 0
    %p228 = por %p226, %p227
    %p229 = scmp.ne.s32.totalorder %s221, %s223
    %p230 = scmp.eq.s32.totalorder %s24, 1
    %p231 = por %p229, %p230
    %p232 = scmp.ne.s32.totalorder %s223, %s224
    %p233 = scmp.eq.s32.totalorder %s24, 0
    %p234 = por %p232, %p233
    %p235 = scmp.ne.s32.totalorder %s223, %s224
    %p236 = scmp.eq.s32.totalorder %s25, 1
    %p237 = por %p235, %p236
    %p239 = scmp.ne.s32.totalorder %s224, %s238
    %p240 = scmp.eq.s32.totalorder %s25, 0
    %p241 = por %p239, %p240
    %s243 = sadd.s32 %s242, 1
    %p246 = scmp.eq.s32.totalorder %s19, 1
    %p247 = scmp.ne.s32.totalorder %s242, %s244
    %p248 = scmp.eq.s32.totalorder %s19, 0
    %p249 = por %p247, %p248
    %p250 = scmp.ne.s32.totalorder %s242, %s244
    %p251 = scmp.eq.s32.totalorder %s24, 1
    %p252 = por %p250, %p251
    %p253 = scmp.ne.s32.totalorder %s244, %s245
    %p254 = scmp.eq.s32.totalorder %s24, 0
    %p255 = por %p253, %p254
    %p256 = scmp.ne.s32.totalorder %s244, %s245
    %p257 = scmp.eq.s32.totalorder %s25, 1
    %p258 = por %p256, %p257
    %p260 = scmp.ne.s32.totalorder %s245, %s259
    %p261 = scmp.eq.s32.totalorder %s25, 0
    %p262 = por %p260, %p261
    %s264 = sadd.s32 %s263, 1
    %p267 = scmp.eq.s32.totalorder %s19, 1
    %p268 = scmp.ne.s32.totalorder %s263, %s265
    %p269 = scmp.eq.s32.totalorder %s19, 0
    %p270 = por %p268, %p269
    %p271 = scmp.ne.s32.totalorder %s263, %s265
    %p272 = scmp.eq.s32.totalorder %s24, 1
    %p273 = por %p271, %p272
    %p274 = scmp.ne.s32.totalorder %s265, %s266
    %p275 = scmp.eq.s32.totalorder %s24, 0
    %p276 = por %p274, %p275
    %p277 = scmp.ne.s32.totalorder %s265, %s266
    %p278 = scmp.eq.s32.totalorder %s25, 1
    %p279 = por %p277, %p278
    %p281 = scmp.ne.s32.totalorder %s266, %s280
    %p282 = scmp.eq.s32.totalorder %s25, 0
    %p283 = por %p281, %p282
    %s285 = sadd.s32 %s284, 1
    %p288 = scmp.eq.s32.totalorder %s19, 1
    %p289 = scmp.ne.s32.totalorder %s284, %s286
    %p290 = scmp.eq.s32.totalorder %s19, 0
    %p291 = por %p289, %p290
    %p292 = scmp.ne.s32.totalorder %s284, %s286
    %p293 = scmp.eq.s32.totalorder %s24, 1
    %p294 = por %p292, %p293
    %p295 = scmp.ne.s32.totalorder %s286, %s287
    %p296 = scmp.eq.s32.totalorder %s24, 0
    %p297 = por %p295, %p296
    %p298 = scmp.ne.s32.totalorder %s286, %s287
    %p299 = scmp.eq.s32.totalorder %s25, 1
    %p300 = por %p298, %p299
    %p302 = scmp.ne.s32.totalorder %s287, %s301
    %p303 = scmp.eq.s32.totalorder %s25, 0
    %p304 = por %p302, %p303
    %s305 = ssub.s32 %s19, %s26
    %p306 = scmp.eq.s32.totalorder %s305, 0
    %s308 = sadd.s32 %s307, 1
    %s309 = scalar_select %p306, %s307, %s308
    %p312 = pneg %p306
    %p313 = scmp.eq.s32.totalorder %s19, 1
    %p314 = por %p312, %p313
    %p315 = scmp.ne.s32.totalorder %s307, %s310
    %p316 = scmp.eq.s32.totalorder %s19, 0
    %p317 = por %p315, %p316
    %p318 = scmp.ne.s32.totalorder %s307, %s310
    %p319 = scmp.eq.s32.totalorder %s24, 1
    %p320 = por %p318, %p319
    %p321 = scmp.ne.s32.totalorder %s310, %s311
    %p322 = scmp.eq.s32.totalorder %s24, 0
    %p323 = por %p321, %p322
    %p324 = scmp.ne.s32.totalorder %s310, %s311
    %p325 = scmp.eq.s32.totalorder %s25, 1
    %p326 = por %p324, %p325
    %p328 = scmp.ne.s32.totalorder %s311, %s327
    %p329 = scmp.eq.s32.totalorder %s25, 0
    %p330 = por %p328, %p329
    %p331 = scmp.le.s32.totalorder 1, %s19
    %p332 = scmp.lt.s32.totalorder %s19, 3
    %p333 = pnand %p331, %p332
    %p334 = pneg %p333
    // Predicated region
    $region9: #{tpu_custom_call.1} parent=5 // pred_check
      _
    $region10: #{tpu_custom_call.1} parent=5 // pred_check_branch
      %336 = sbr.rel (%p333) target = $region12
    $region11: #{tpu_custom_call.1} parent=5 // pred_region
      %s337 = ssub.s32 %s19, 1
      // Predicated region
      $region13: #{tpu_custom_call.1} parent=11 // pred_check
        %p338 = pneg %p66
      $region14: #{tpu_custom_call.1} parent=11 // pred_check_branch
        %340 = sbr.rel (%p338) target = $region16
      $region15: #{tpu_custom_call.1} parent=11 // pred_region
        _
      $region16: #{tpu_custom_call.1} parent=11 // pred_fallthru
        _
      // Predicated region
      $region17: #{tpu_custom_call.1} parent=11 // pred_check
        %p341 = pneg %p87
      $region18: #{tpu_custom_call.1} parent=11 // pred_check_branch
        %343 = sbr.rel (%p341) target = $region20
      $region19: #{tpu_custom_call.1} parent=11 // pred_region
        _
      $region20: #{tpu_custom_call.1} parent=11 // pred_fallthru
        _
      // Predicated region
      $region21: #{tpu_custom_call.1} parent=11 // pred_check
        %p344 = pneg %p108
      $region22: #{tpu_custom_call.1} parent=11 // pred_check_branch
        %346 = sbr.rel (%p344) target = $region24
      $region23: #{tpu_custom_call.1} parent=11 // pred_region
        _
      $region24: #{tpu_custom_call.1} parent=11 // pred_fallthru
        _
      // Predicated region
      $region25: #{tpu_custom_call.1} parent=11 // pred_check
        %p347 = pneg %p129
      $region26: #{tpu_custom_call.1} parent=11 // pred_check_branch
        %349 = sbr.rel (%p347) target = $region28
      $region27: #{tpu_custom_call.1} parent=11 // pred_region
        _
      $region28: #{tpu_custom_call.1} parent=11 // pred_fallthru
        _
      // Predicated region
      $region29: #{tpu_custom_call.1} parent=11 // pred_check
        %p350 = pneg %p150
      $region30: #{tpu_custom_call.1} parent=11 // pred_check_branch
        %352 = sbr.rel (%p350) target = $region32
      $region31: #{tpu_custom_call.1} parent=11 // pred_region
        _
      $region32: #{tpu_custom_call.1} parent=11 // pred_fallthru
        _
      // Predicated region
      $region33: #{tpu_custom_call.1} parent=11 // pred_check
        %p353 = pneg %p171
      $region34: #{tpu_custom_call.1} parent=11 // pred_check_branch
        %355 = sbr.rel (%p353) target = $region36
      $region35: #{tpu_custom_call.1} parent=11 // pred_region
        _
      $region36: #{tpu_custom_call.1} parent=11 // pred_fallthru
        _
      // Predicated region
      $region37: #{tpu_custom_call.1} parent=11 // pred_check
        %p356 = pneg %p192
      $region38: #{tpu_custom_call.1} parent=11 // pred_check_branch
        %358 = sbr.rel (%p356) target = $region40
      $region39: #{tpu_custom_call.1} parent=11 // pred_region
        _
      $region40: #{tpu_custom_call.1} parent=11 // pred_fallthru
        _
      // Predicated region
      $region41: #{tpu_custom_call.1} parent=11 // pred_check
        %p359 = pneg %p213
      $region42: #{tpu_custom_call.1} parent=11 // pred_check_branch
        %361 = sbr.rel (%p359) target = $region44
      $region43: #{tpu_custom_call.1} parent=11 // pred_region
        _
      $region44: #{tpu_custom_call.1} parent=11 // pred_fallthru
        _
      // Predicated region
      $region45: #{tpu_custom_call.1} parent=11 // pred_check
        %p362 = pneg %p234
      $region46: #{tpu_custom_call.1} parent=11 // pred_check_branch
        %364 = sbr.rel (%p362) target = $region48
      $region47: #{tpu_custom_call.1} parent=11 // pred_region
        _
      $region48: #{tpu_custom_call.1} parent=11 // pred_fallthru
        _
      // Predicated region
      $region49: #{tpu_custom_call.1} parent=11 // pred_check
        %p365 = pneg %p255
      $region50: #{tpu_custom_call.1} parent=11 // pred_check_branch
        %367 = sbr.rel (%p365) target = $region52
      $region51: #{tpu_custom_call.1} parent=11 // pred_region
        _
      $region52: #{tpu_custom_call.1} parent=11 // pred_fallthru
        _
      // Predicated region
      $region53: #{tpu_custom_call.1} parent=11 // pred_check
        %p368 = pneg %p276
      $region54: #{tpu_custom_call.1} parent=11 // pred_check_branch
        %370 = sbr.rel (%p368) target = $region56
      $region55: #{tpu_custom_call.1} parent=11 // pred_region
        _
      $region56: #{tpu_custom_call.1} parent=11 // pred_fallthru
        _
      // Predicated region
      $region57: #{tpu_custom_call.1} parent=11 // pred_check
        %p371 = pneg %p297
      $region58: #{tpu_custom_call.1} parent=11 // pred_check_branch
        %373 = sbr.rel (%p371) target = $region60
      $region59: #{tpu_custom_call.1} parent=11 // pred_region
        _
      $region60: #{tpu_custom_call.1} parent=11 // pred_fallthru
        _
    $region12: #{tpu_custom_call.1} parent=5 // pred_fallthru
      _
    %p374 = scmp.lt.s32.totalorder %s19, 2
    // Predicated region
    $region61: #{tpu_custom_call.1} parent=5 // pred_check
      %p375 = pneg %p374
    $region62: #{tpu_custom_call.1} parent=5 // pred_check_branch
      %377 = sbr.rel (%p375) target = $region64
    $region63: #{tpu_custom_call.1} parent=5 // pred_region
      // Predicated region
      $region65: #{tpu_custom_call.1} parent=63 // pred_check
        %p378 = pneg %p39
      $region66: #{tpu_custom_call.1} parent=63 // pred_check_branch
        %380 = sbr.rel (%p378) target = $region68
      $region67: #{tpu_custom_call.1} parent=63 // pred_region
        %p381 = scmp.lt.s32.totalorder %s19, 1
        %s382 = scalar_select %p381, %s19, 1
        %s383 = smul.addr %s382, 8
        %s384 = scalar_lea.vmem %s0, %s383
      $region68: #{tpu_custom_call.1} parent=63 // pred_fallthru
        _
    $region64: #{tpu_custom_call.1} parent=5 // pred_fallthru
      _
    %p385 = scmp.le.s32.totalorder 1, %s19
    %p386 = scmp.lt.s32.totalorder %s19, 3
    %p387 = pnand %p385, %p386
    %p388 = pneg %p387
    // Predicated region
    $region69: #{tpu_custom_call.1} parent=5 // pred_check
      _
    $region70: #{tpu_custom_call.1} parent=5 // pred_check_branch
      %390 = sbr.rel (%p387) target = $region72
    $region71: #{tpu_custom_call.1} parent=5 // pred_region
      %s391 = ssub.s32 %s19, 1
      %p392 = scmp.lt.s32.totalorder %s24, 1
      %s393 = scalar_select %p392, %s24, 1
      %s394 = smul.addr %s393, 8
      %s395 = scalar_lea.vmem %s0, %s394
      %p396 = pneg %p45
      %p397 = pneg %p42
      %p398 = pneg %p66
      %p399 = pneg %p63
      %p400 = pneg %p87
      %p401 = pneg %p84
      %p402 = pneg %p108
      %p403 = pneg %p105
      %p404 = pneg %p129
      %p405 = pneg %p126
      %p406 = pneg %p150
      %p407 = pneg %p147
      %p408 = pneg %p171
      %p409 = pneg %p168
      %p410 = pneg %p192
      %p411 = pneg %p189
      %p412 = pneg %p213
      %p413 = pneg %p210
      %p414 = pneg %p234
      %p415 = pneg %p231
      %p416 = pneg %p255
      %p417 = pneg %p252
      %p418 = pneg %p276
      %p419 = pneg %p273
      %p420 = pneg %p297
      %p421 = pneg %p294
      %p422 = pneg %p323
      %p423 = pneg %p320
      %p424 = scmp.lt.s32.totalorder %s24, 1
      %s425 = scalar_select %p424, %s24, 1
      %s426 = smul.addr %s425, 8
      %s427 = scalar_lea.vmem %s13, %s426
      %p428 = scmp.lt.s32.totalorder %s24, 1
      %s429 = scalar_select %p428, %s24, 1
      %s430 = smul.addr %s429, 8
      %s431 = scalar_lea.vmem %s0, %s430
      %p432 = scmp.lt.s32.totalorder %s24, 1
      %s433 = scalar_select %p432, %s24, 1
      %s434 = smul.addr %s433, 8
      %s435 = scalar_lea.vmem %s13, %s434
      %v437 = vld [vmem:[%s431] sm:$0xff]
      %v438 = vpack.c.bf16 %v437, %v437
      %v439 = vld [vmem:[%s1] sm:$0xf]
      %v440 = vld [vmem:[%s1 + $0x4] sm:$0xf]
      %v441 = vld [vmem:[%s2] sm:$0x1]
      %v443 = vlaneseq
      %v444 = vshrl.u32 %v443, 7
      %v445 = vsub.s32 0, %v444
      %v446 = vrot.slane %v441, %v445
      %v450 = vunpack.c.l.b16 %v439
      %v451 = vunpack.c.l.b16 %v440
      %v452 = vpack.c.b16 %v451, %v450
      %vm454 = vcmask 130048
      %v456 = vsel %vm454, %v438, 0
      %458 = vmatprep.subr.bf16.mxu0 0
      %459 = vmatpush1.bf16.msra.mxu0 %v452
      %460 = vmatprep.subr.bf16.mxu0 0
      %461 = vmatpush1.bf16.msra.mxu0 0
      %462 = vmatprep.subr.bf16.mxu0 0
      %463 = vmatpush1.bf16.msra.mxu0 0
      %464 = vmatprep.subr.bf16.mxu0 0
      %465 = vmatpush1.bf16.msra.mxu0 0
      %466 = vmatprep.subr.bf16.mxu0 0
      %467 = vmatpush1.bf16.msra.mxu0 0
      %468 = vmatprep.subr.bf16.mxu0 0
      %469 = vmatpush1.bf16.msra.mxu0 0
      %470 = vmatprep.subr.bf16.mxu0 0
      %471 = vmatpush1.bf16.msra.mxu0 0
      %472 = vmatprep.subr.bf16.mxu0 0
      %473 = vmatpush1.bf16.msra.mxu0 0
      %474 = vmatprep.subr.bf16.mxu0 0
      %475 = vmatpush1.bf16.msra.mxu0 0
      %476 = vmatprep.subr.bf16.mxu0 0
      %477 = vmatpush1.bf16.msra.mxu0 0
      %478 = vmatprep.subr.bf16.mxu0 0
      %479 = vmatpush1.bf16.msra.mxu0 0
      %480 = vmatprep.subr.bf16.mxu0 0
      %481 = vmatpush1.bf16.msra.mxu0 0
      %482 = vmatprep.subr.bf16.mxu0 0
      %483 = vmatpush1.bf16.msra.mxu0 0
      %484 = vmatprep.subr.bf16.mxu0 0
      %485 = vmatpush1.bf16.msra.mxu0 0
      %486 = vmatprep.subr.bf16.mxu0 0
      %487 = vmatpush1.bf16.msra.mxu0 0
      %488 = vmatprep.subr.bf16.mxu0 0
      %489 = vmatpush1.bf16.msra.mxu0 0
      %490 = vmatprep.mubr.bf16.mxu0 0
      %491 = vmatmul.mubr.bf16.gmra.mrb[0].mxu0 %v456
      %v492 = vpop.f32.mrb[0].mxu0
      %v493 = vadd.f32 %v446, %v492
      %v494 = vpop.f32.mrb[0].mxu0
      %v495 = vpop.f32.mrb[0].mxu0
      %v496 = vpop.f32.mrb[0].mxu0
      %497 = vdwg.mxu0
      %vm498 = vcmp.gt.f32.partialorder %v493, 0.0
      %v499 = vmul.f32 %v493, 1.442695
      %v500 = vpow.pop %v499
      %v501 = vsub.f32 %v500, 1.0
      %v502 = vmul.f32 %v501, 1.6732632
      %v503 = vsel %vm498, %v493, %v502
      %v504 = vmul.f32 %v503, 1.050701
      %v505 = vpack.c.bf16 %v504, %v504
      %v506 = vld [vmem:[%s3] sm:$0xf]
      %v507 = vld [vmem:[%s3 + $0x4] sm:$0xf]
      %v508 = vld [vmem:[%s3 + $0x8] sm:$0xf]
      %v509 = vld [vmem:[%s3 + $0xc] sm:$0xf]
      %v510 = vld [vmem:[%s3 + $0x10] sm:$0xf]
      %v511 = vld [vmem:[%s3 + $0x14] sm:$0xf]
      %v512 = vld [vmem:[%s3 + $0x18] sm:$0xf]
      %v513 = vld [vmem:[%s3 + $0x1c] sm:$0xf]
      %v514 = vld [vmem:[%s3 + $0x20] sm:$0xf]
      %v515 = vld [vmem:[%s3 + $0x24] sm:$0xf]
      %v516 = vld [vmem:[%s3 + $0x28] sm:$0xf]
      %v517 = vld [vmem:[%s3 + $0x2c] sm:$0xf]
      %v518 = vld [vmem:[%s3 + $0x30] sm:$0xf]
      %v519 = vld [vmem:[%s3 + $0x34] sm:$0xf]
      %v520 = vld [vmem:[%s3 + $0x38] sm:$0xf]
      %v521 = vld [vmem:[%s3 + $0x3c] sm:$0xf]
      %v522 = vld [vmem:[%s4] sm:$0x1]
      %v524 = vlaneseq
      %v525 = vshrl.u32 %v524, 7
      %v526 = vsub.s32 0, %v525
      %v527 = vrot.slane %v522, %v526
      %v545 = vunpack.c.l.b16 %v506
      %v546 = vunpack.c.l.b16 %v507
      %v547 = vunpack.c.l.b16 %v508
      %v548 = vunpack.c.l.b16 %v509
      %v549 = vunpack.c.l.b16 %v510
      %v550 = vunpack.c.l.b16 %v511
      %v551 = vunpack.c.l.b16 %v512
      %v552 = vunpack.c.l.b16 %v513
      %v553 = vunpack.c.l.b16 %v514
      %v554 = vunpack.c.l.b16 %v515
      %v555 = vunpack.c.l.b16 %v516
      %v556 = vunpack.c.l.b16 %v517
      %v557 = vunpack.c.l.b16 %v518
      %v558 = vunpack.c.l.b16 %v519
      %v559 = vunpack.c.l.b16 %v520
      %v560 = vunpack.c.l.b16 %v521
      %v561 = vpack.c.b16 %v546, %v545
      %v562 = vpack.c.b16 %v548, %v547
      %v563 = vpack.c.b16 %v550, %v549
      %v564 = vpack.c.b16 %v552, %v551
      %v565 = vpack.c.b16 %v554, %v553
      %v566 = vpack.c.b16 %v556, %v555
      %v567 = vpack.c.b16 %v558, %v557
      %v568 = vpack.c.b16 %v560, %v559
      %577 = vmatprep.subr.bf16.mxu0 0
      %578 = vmatpush1.bf16.msra.mxu0 %v561
      %579 = vmatprep.subr.bf16.mxu0 0
      %580 = vmatpush1.bf16.msra.mxu0 %v562
      %581 = vmatprep.subr.bf16.mxu0 0
      %582 = vmatpush1.bf16.msra.mxu0 %v563
      %583 = vmatprep.subr.bf16.mxu0 0
      %584 = vmatpush1.bf16.msra.mxu0 %v564
      %585 = vmatprep.subr.bf16.mxu0 0
      %586 = vmatpush1.bf16.msra.mxu0 %v565
      %587 = vmatprep.subr.bf16.mxu0 0
      %588 = vmatpush1.bf16.msra.mxu0 %v566
      %589 = vmatprep.subr.bf16.mxu0 0
      %590 = vmatpush1.bf16.msra.mxu0 %v567
      %591 = vmatprep.subr.bf16.mxu0 0
      %592 = vmatpush1.bf16.msra.mxu0 %v568
      %593 = vmatprep.subr.bf16.mxu0 0
      %594 = vmatpush1.bf16.msra.mxu0 0
      %595 = vmatprep.subr.bf16.mxu0 0
      %596 = vmatpush1.bf16.msra.mxu0 0
      %597 = vmatprep.subr.bf16.mxu0 0
      %598 = vmatpush1.bf16.msra.mxu0 0
      %599 = vmatprep.subr.bf16.mxu0 0
      %600 = vmatpush1.bf16.msra.mxu0 0
      %601 = vmatprep.subr.bf16.mxu0 0
      %602 = vmatpush1.bf16.msra.mxu0 0
      %603 = vmatprep.subr.bf16.mxu0 0
      %604 = vmatpush1.bf16.msra.mxu0 0
      %605 = vmatprep.subr.bf16.mxu0 0
      %606 = vmatpush1.bf16.msra.mxu0 0
      %607 = vmatprep.subr.bf16.mxu0 0
      %608 = vmatpush1.bf16.msra.mxu0 0
      %609 = vmatprep.mubr.bf16.mxu0 0
      %610 = vmatmul.mubr.bf16.gmra.mrb[0].mxu0 %v505
      %v611 = vpop.f32.mrb[0].mxu0
      %v612 = vadd.f32 %v527, %v611
      %v613 = vpop.f32.mrb[0].mxu0
      %v614 = vpop.f32.mrb[0].mxu0
      %v615 = vpop.f32.mrb[0].mxu0
      %616 = vdwg.mxu0
      %vm617 = vcmp.gt.f32.partialorder %v612, 0.0
      %v618 = vmul.f32 %v612, 1.442695
      %v619 = vpow.pop %v618
      %v620 = vsub.f32 %v619, 1.0
      %v621 = vmul.f32 %v620, 1.6732632
      %v622 = vsel %vm617, %v612, %v621
      %v623 = vmul.f32 %v622, 1.050701
      %v624 = vpack.c.bf16 %v623, %v623
      %v625 = vld [vmem:[%s5] sm:$0xf]
      %v626 = vld [vmem:[%s5 + $0x4] sm:$0xf]
      %v627 = vld [vmem:[%s5 + $0x8] sm:$0xf]
      %v628 = vld [vmem:[%s5 + $0xc] sm:$0xf]
      %v629 = vld [vmem:[%s5 + $0x10] sm:$0xf]
      %v630 = vld [vmem:[%s5 + $0x14] sm:$0xf]
      %v631 = vld [vmem:[%s5 + $0x18] sm:$0xf]
      %v632 = vld [vmem:[%s5 + $0x1c] sm:$0xf]
      %v633 = vld [vmem:[%s6] sm:$0x1]
      %v635 = vlaneseq
      %v636 = vshrl.u32 %v635, 7
      %v637 = vsub.s32 0, %v636
      %v638 = vrot.slane %v633, %v637
      %v648 = vunpack.c.l.b16 %v625
      %v649 = vunpack.c.l.b16 %v626
      %v650 = vunpack.c.l.b16 %v627
      %v651 = vunpack.c.l.b16 %v628
      %v652 = vunpack.c.l.b16 %v629
      %v653 = vunpack.c.l.b16 %v630
      %v654 = vunpack.c.l.b16 %v631
      %v655 = vunpack.c.l.b16 %v632
      %v656 = vpack.c.b16 %v649, %v648
      %v657 = vpack.c.b16 %v651, %v650
      %v658 = vpack.c.b16 %v653, %v652
      %v659 = vpack.c.b16 %v655, %v654
      %vm664 = vcmask 523264
      %v666 = vsel %vm664, %v624, 0
      %668 = vmatprep.subr.bf16.mxu0 0
      %669 = vmatpush1.bf16.msra.mxu0 %v656
      %670 = vmatprep.subr.bf16.mxu0 0
      %671 = vmatpush1.bf16.msra.mxu0 %v657
      %672 = vmatprep.subr.bf16.mxu0 0
      %673 = vmatpush1.bf16.msra.mxu0 %v658
      %674 = vmatprep.subr.bf16.mxu0 0
      %675 = vmatpush1.bf16.msra.mxu0 %v659
      %676 = vmatprep.subr.bf16.mxu0 0
      %677 = vmatpush1.bf16.msra.mxu0 0
      %678 = vmatprep.subr.bf16.mxu0 0
      %679 = vmatpush1.bf16.msra.mxu0 0
      %680 = vmatprep.subr.bf16.mxu0 0
      %681 = vmatpush1.bf16.msra.mxu0 0
      %682 = vmatprep.subr.bf16.mxu0 0
      %683 = vmatpush1.bf16.msra.mxu0 0
      %684 = vmatprep.subr.bf16.mxu0 0
      %685 = vmatpush1.bf16.msra.mxu0 0
      %686 = vmatprep.subr.bf16.mxu0 0
      %687 = vmatpush1.bf16.msra.mxu0 0
      %688 = vmatprep.subr.bf16.mxu0 0
      %689 = vmatpush1.bf16.msra.mxu0 0
      %690 = vmatprep.subr.bf16.mxu0 0
      %691 = vmatpush1.bf16.msra.mxu0 0
      %692 = vmatprep.subr.bf16.mxu0 0
      %693 = vmatpush1.bf16.msra.mxu0 0
      %694 = vmatprep.subr.bf16.mxu0 0
      %695 = vmatpush1.bf16.msra.mxu0 0
      %696 = vmatprep.subr.bf16.mxu0 0
      %697 = vmatpush1.bf16.msra.mxu0 0
      %698 = vmatprep.subr.bf16.mxu0 0
      %699 = vmatpush1.bf16.msra.mxu0 0
      %700 = vmatprep.mubr.bf16.mxu0 0
      %701 = vmatmul.mubr.bf16.gmra.mrb[0].mxu0 %v666
      %v702 = vpop.f32.mrb[0].mxu0
      %v703 = vadd.f32 %v638, %v702
      %v704 = vpop.f32.mrb[0].mxu0
      %v705 = vpop.f32.mrb[0].mxu0
      %v706 = vpop.f32.mrb[0].mxu0
      %707 = vdwg.mxu0
      %vm708 = vcmp.gt.f32.partialorder %v703, 0.0
      %v709 = vmul.f32 %v703, 1.442695
      %v710 = vpow.pop %v709
      %v711 = vsub.f32 %v710, 1.0
      %v712 = vmul.f32 %v711, 1.6732632
      %v713 = vsel %vm708, %v703, %v712
      %v714 = vmul.f32 %v713, 1.050701
      %v715 = vpack.c.bf16 %v714, %v714
      %v716 = vld [vmem:[%s7] sm:$0xf]
      %v717 = vld [vmem:[%s7 + $0x4] sm:$0xf]
      %v718 = vld [vmem:[%s7 + $0x8] sm:$0xf]
      %v719 = vld [vmem:[%s7 + $0xc] sm:$0xf]
      %v720 = vld [vmem:[%s7 + $0x10] sm:$0xf]
      %v721 = vld [vmem:[%s7 + $0x14] sm:$0xf]
      %v722 = vld [vmem:[%s7 + $0x18] sm:$0xf]
      %v723 = vld [vmem:[%s7 + $0x1c] sm:$0xf]
      %v724 = vld [vmem:[%s8] sm:$0x1]
      %v726 = vlaneseq
      %v727 = vshrl.u32 %v726, 7
      %v728 = vsub.s32 0, %v727
      %v729 = vrot.slane %v724, %v728
      %v739 = vunpack.c.l.b16 %v716
      %v740 = vunpack.c.l.b16 %v717
      %v741 = vunpack.c.l.b16 %v718
      %v742 = vunpack.c.l.b16 %v719
      %v743 = vunpack.c.l.b16 %v720
      %v744 = vunpack.c.l.b16 %v721
      %v745 = vunpack.c.l.b16 %v722
      %v746 = vunpack.c.l.b16 %v723
      %v747 = vpack.c.b16 %v740, %v739
      %v748 = vpack.c.b16 %v742, %v741
      %v749 = vpack.c.b16 %v744, %v743
      %v750 = vpack.c.b16 %v746, %v745
      %v756 = vsel %vm664, %v715, 0
      %758 = vmatprep.subr.bf16.mxu0 0
      %759 = vmatpush1.bf16.msra.mxu0 %v747
      %760 = vmatprep.subr.bf16.mxu0 0
      %761 = vmatpush1.bf16.msra.mxu0 %v748
      %762 = vmatprep.subr.bf16.mxu0 0
      %763 = vmatpush1.bf16.msra.mxu0 %v749
      %764 = vmatprep.subr.bf16.mxu0 0
      %765 = vmatpush1.bf16.msra.mxu0 %v750
      %766 = vmatprep.subr.bf16.mxu0 0
      %767 = vmatpush1.bf16.msra.mxu0 0
      %768 = vmatprep.subr.bf16.mxu0 0
      %769 = vmatpush1.bf16.msra.mxu0 0
      %770 = vmatprep.subr.bf16.mxu0 0
      %771 = vmatpush1.bf16.msra.mxu0 0
      %772 = vmatprep.subr.bf16.mxu0 0
      %773 = vmatpush1.bf16.msra.mxu0 0
      %774 = vmatprep.subr.bf16.mxu0 0
      %775 = vmatpush1.bf16.msra.mxu0 0
      %776 = vmatprep.subr.bf16.mxu0 0
      %777 = vmatpush1.bf16.msra.mxu0 0
      %778 = vmatprep.subr.bf16.mxu0 0
      %779 = vmatpush1.bf16.msra.mxu0 0
      %780 = vmatprep.subr.bf16.mxu0 0
      %781 = vmatpush1.bf16.msra.mxu0 0
      %782 = vmatprep.subr.bf16.mxu0 0
      %783 = vmatpush1.bf16.msra.mxu0 0
      %784 = vmatprep.subr.bf16.mxu0 0
      %785 = vmatpush1.bf16.msra.mxu0 0
      %786 = vmatprep.subr.bf16.mxu0 0
      %787 = vmatpush1.bf16.msra.mxu0 0
      %788 = vmatprep.subr.bf16.mxu0 0
      %789 = vmatpush1.bf16.msra.mxu0 0
      %790 = vmatprep.mubr.bf16.mxu0 0
      %791 = vmatmul.mubr.bf16.gmra.mrb[0].mxu0 %v756
      %v792 = vpop.f32.mrb[0].mxu0
      %v793 = vadd.f32 %v729, %v792
      %v794 = vpop.f32.mrb[0].mxu0
      %v795 = vpop.f32.mrb[0].mxu0
      %v796 = vpop.f32.mrb[0].mxu0
      %797 = vdwg.mxu0
      %vm798 = vcmp.gt.f32.partialorder %v793, 0.0
      %v799 = vmul.f32 %v793, 1.442695
      %v800 = vpow.pop %v799
      %v801 = vsub.f32 %v800, 1.0
      %v802 = vmul.f32 %v801, 1.6732632
      %v803 = vsel %vm798, %v793, %v802
      %v804 = vmul.f32 %v803, 1.050701
      %v805 = vpack.c.bf16 %v804, %v804
      %v806 = vld [vmem:[%s9] sm:$0xf]
      %v807 = vld [vmem:[%s9 + $0x4] sm:$0xf]
      %v808 = vld [vmem:[%s9 + $0x8] sm:$0xf]
      %v809 = vld [vmem:[%s9 + $0xc] sm:$0xf]
      %v810 = vld [vmem:[%s10] sm:$0x1]
      %v812 = vlaneseq
      %v813 = vshrl.u32 %v812, 7
      %v814 = vsub.s32 0, %v813
      %v815 = vrot.slane %v810, %v814
      %v821 = vunpack.c.l.b16 %v806
      %v822 = vunpack.c.l.b16 %v807
      %v823 = vunpack.c.l.b16 %v808
      %v824 = vunpack.c.l.b16 %v809
      %v825 = vpack.c.b16 %v822, %v821
      %v826 = vpack.c.b16 %v824, %v823
      %vm829 = vcmask 261120
      %v831 = vsel %vm829, %v805, 0
      %833 = vmatprep.subr.bf16.mxu0 0
      %834 = vmatpush1.bf16.msra.mxu0 %v825
      %835 = vmatprep.subr.bf16.mxu0 0
      %836 = vmatpush1.bf16.msra.mxu0 %v826
      %837 = vmatprep.subr.bf16.mxu0 0
      %838 = vmatpush1.bf16.msra.mxu0 0
      %839 = vmatprep.subr.bf16.mxu0 0
      %840 = vmatpush1.bf16.msra.mxu0 0
      %841 = vmatprep.subr.bf16.mxu0 0
      %842 = vmatpush1.bf16.msra.mxu0 0
      %843 = vmatprep.subr.bf16.mxu0 0
      %844 = vmatpush1.bf16.msra.mxu0 0
      %845 = vmatprep.subr.bf16.mxu0 0
      %846 = vmatpush1.bf16.msra.mxu0 0
      %847 = vmatprep.subr.bf16.mxu0 0
      %848 = vmatpush1.bf16.msra.mxu0 0
      %849 = vmatprep.subr.bf16.mxu0 0
      %850 = vmatpush1.bf16.msra.mxu0 0
      %851 = vmatprep.subr.bf16.mxu0 0
      %852 = vmatpush1.bf16.msra.mxu0 0
      %853 = vmatprep.subr.bf16.mxu0 0
      %854 = vmatpush1.bf16.msra.mxu0 0
      %855 = vmatprep.subr.bf16.mxu0 0
      %856 = vmatpush1.bf16.msra.mxu0 0
      %857 = vmatprep.subr.bf16.mxu0 0
      %858 = vmatpush1.bf16.msra.mxu0 0
      %859 = vmatprep.subr.bf16.mxu0 0
      %860 = vmatpush1.bf16.msra.mxu0 0
      %861 = vmatprep.subr.bf16.mxu0 0
      %862 = vmatpush1.bf16.msra.mxu0 0
      %863 = vmatprep.subr.bf16.mxu0 0
      %864 = vmatpush1.bf16.msra.mxu0 0
      %865 = vmatprep.mubr.bf16.mxu0 0
      %866 = vmatmul.mubr.bf16.gmra.mrb[0].mxu0 %v831
      %v867 = vpop.f32.mrb[0].mxu0
      %v868 = vadd.f32 %v815, %v867
      %v869 = vpop.f32.mrb[0].mxu0
      %v870 = vpop.f32.mrb[0].mxu0
      %v871 = vpop.f32.mrb[0].mxu0
      %872 = vdwg.mxu0
      %vm873 = vcmp.gt.f32.partialorder %v868, 0.0
      %v874 = vmul.f32 %v868, 1.442695
      %v875 = vpow.pop %v874
      %v876 = vsub.f32 %v875, 1.0
      %v877 = vmul.f32 %v876, 1.6732632
      %v878 = vsel %vm873, %v868, %v877
      %v879 = vmul.f32 %v878, 1.050701
      %v880 = vpack.c.bf16 %v879, %v879
      %v881 = vld [vmem:[%s11] sm:$0xf]
      %v882 = vld [vmem:[%s11 + $0x4] sm:$0xf]
      %v883 = vld [vmem:[%s11 + $0x8] sm:$0xf]
      %v884 = vld [vmem:[%s11 + $0xc] sm:$0xf]
      %v885 = vld [vmem:[%s12] sm:$0x1]
      %v887 = vlaneseq
      %v888 = vshrl.u32 %v887, 7
      %v889 = vsub.s32 0, %v888
      %v890 = vrot.slane %v885, %v889
      %v896 = vunpack.c.l.b16 %v881
      %v897 = vunpack.c.l.b16 %v882
      %v898 = vunpack.c.l.b16 %v883
      %v899 = vunpack.c.l.b16 %v884
      %v900 = vpack.c.b16 %v897, %v896
      %v901 = vpack.c.b16 %v899, %v898
      %v905 = vsel %vm829, %v880, 0
      %907 = vmatprep.subr.bf16.mxu0 0
      %908 = vmatpush1.bf16.msra.mxu0 %v900
      %909 = vmatprep.subr.bf16.mxu0 0
      %910 = vmatpush1.bf16.msra.mxu0 %v901
      %911 = vmatprep.subr.bf16.mxu0 0
      %912 = vmatpush1.bf16.msra.mxu0 0
      %913 = vmatprep.subr.bf16.mxu0 0
      %914 = vmatpush1.bf16.msra.mxu0 0
      %915 = vmatprep.subr.bf16.mxu0 0
      %916 = vmatpush1.bf16.msra.mxu0 0
      %917 = vmatprep.subr.bf16.mxu0 0
      %918 = vmatpush1.bf16.msra.mxu0 0
      %919 = vmatprep.subr.bf16.mxu0 0
      %920 = vmatpush1.bf16.msra.mxu0 0
      %921 = vmatprep.subr.bf16.mxu0 0
      %922 = vmatpush1.bf16.msra.mxu0 0
      %923 = vmatprep.subr.bf16.mxu0 0
      %924 = vmatpush1.bf16.msra.mxu0 0
      %925 = vmatprep.subr.bf16.mxu0 0
      %926 = vmatpush1.bf16.msra.mxu0 0
      %927 = vmatprep.subr.bf16.mxu0 0
      %928 = vmatpush1.bf16.msra.mxu0 0
      %929 = vmatprep.subr.bf16.mxu0 0
      %930 = vmatpush1.bf16.msra.mxu0 0
      %931 = vmatprep.subr.bf16.mxu0 0
      %932 = vmatpush1.bf16.msra.mxu0 0
      %933 = vmatprep.subr.bf16.mxu0 0
      %934 = vmatpush1.bf16.msra.mxu0 0
      %935 = vmatprep.subr.bf16.mxu0 0
      %936 = vmatpush1.bf16.msra.mxu0 0
      %937 = vmatprep.subr.bf16.mxu0 0
      %938 = vmatpush1.bf16.msra.mxu0 0
      %939 = vmatprep.mubr.bf16.mxu0 0
      %940 = vmatmul.mubr.bf16.gmra.mrb[0].mxu0 %v905
      %v941 = vpop.f32.mrb[0].mxu0
      %v942 = vadd.f32 %v890, %v941
      %v943 = vpop.f32.mrb[0].mxu0
      %v944 = vpop.f32.mrb[0].mxu0
      %v945 = vpop.f32.mrb[0].mxu0
      %946 = vdwg.mxu0
      %v947 = vsub.f32 0.0, %v942
      %v948 = vmul.f32 %v947, 1.442695
      %v949 = vpow.pop %v948
      %v950 = vadd.f32 %v949, 1.0
      %v951 = vrcp.pop %v950
      %vm952 = vcmask 31744
      %953 = vst.msk [vmem:[%s435] sm:$0xff] %vm952, %v951
      %p954 = scmp.lt.s32.totalorder %s24, 1
      %s955 = scalar_select %p954, %s24, 1
      %s956 = smul.addr %s955, 8
      %s957 = scalar_lea.vmem %s13, %s956
      // Predicated region
      $region73: #{tpu_custom_call.1} parent=71 // pred_check
        %p958 = pneg %p320
      $region74: #{tpu_custom_call.1} parent=71 // pred_check_branch
        %960 = sbr.rel (%p958) target = $region76
      $region75: #{tpu_custom_call.1} parent=71 // pred_region
        _
      $region76: #{tpu_custom_call.1} parent=71 // pred_fallthru
        _
    $region72: #{tpu_custom_call.1} parent=5 // pred_fallthru
      _
    %p961 = scmp.le.s32.totalorder 2, %s19
    // Predicated region
    $region77: #{tpu_custom_call.1} parent=5 // pred_check
      %p962 = pneg %p961
    $region78: #{tpu_custom_call.1} parent=5 // pred_check_branch
      %964 = sbr.rel (%p962) target = $region80
    $region79: #{tpu_custom_call.1} parent=5 // pred_region
      %s965 = ssub.s32 %s19, 2
      // Predicated region
      $region81: #{tpu_custom_call.1} parent=79 // pred_check
        %p966 = pneg %p326
      $region82: #{tpu_custom_call.1} parent=79 // pred_check_branch
        %968 = sbr.rel (%p966) target = $region84
      $region83: #{tpu_custom_call.1} parent=79 // pred_region
        %p969 = scmp.lt.s32.totalorder %s25, 1
        %s970 = scalar_select %p969, %s25, 1
        %s971 = smul.addr %s970, 8
        %s972 = scalar_lea.vmem %s13, %s971
      $region84: #{tpu_custom_call.1} parent=79 // pred_fallthru
        _
    $region80: #{tpu_custom_call.1} parent=5 // pred_fallthru
      _
  $region6: #{tpu_custom_call.1} parent=0 // loop_footer
    %s23 = sadd.s32 1, %s19
  $region7: #{tpu_custom_call.1} parent=0 // loop_footer_branch
    %18 = sbr.rel target = $region3
  $region8: #{tpu_custom_call.1} parent=0 // loop_exit
    _

</llo_original>
